<compile_context>
chip_gen: v6e
topology: v6e:2x2x1
jax: 0.10.0
libtpu: 0.0.40
codegen_flags: <defaults>
</compile_context>

<pallas_src>
import functools

import jax
import jax.numpy as jnp
from jax.experimental import pallas as pl
from jax.experimental.pallas import tpu as pltpu


def _tanhexp_kernel(x_ref, o_ref, *, compute_dtype):
    x = x_ref[...].astype(compute_dtype)
    o_ref[...] = (x * jnp.tanh(jnp.exp(x))).astype(o_ref.dtype)


def _chip_generation() -> str:
    """Best-effort TPU generation detection; falls back to conservative defaults."""
    try:
        kind = jax.devices()[0].device_kind.lower()
    except Exception:
        return "other"
    if "v7" in kind:
        return "v7"
    if "v6" in kind:
        return "v6"
    if "v5e" in kind or ("v5" in kind and "lite" in kind):
        return "v5e"
    return "other"


def tanh_exp(x: jax.Array) -> jax.Array:
    """Apply tanhexp(x) = x * tanh(exp(x)) elementwise via a Pallas TPU kernel."""
    orig_shape = x.shape
    dtype = x.dtype
    n = x.size
    itemsize = jnp.dtype(dtype).itemsize
    # Sublane multiple for the row block dim, per dtype packing.
    sub = {4: 8, 2: 16, 1: 32}.get(itemsize, 8)

    gen = _chip_generation()
    if gen == "v7":
        target_block_bytes = 8 * 1024 * 1024
        vmem_limit_bytes = 48 * 1024 * 1024
        min_steps = 8           # >= 3-4 steps per TensorCore (2 TCs)
        native_bf16 = True
    elif gen == "v6":
        target_block_bytes = 4 * 1024 * 1024
        vmem_limit_bytes = None  # 16 MiB resident fits the 32 MiB scoped default
        min_steps = 3
        native_bf16 = True
    elif gen == "v5e":
        target_block_bytes = 2 * 1024 * 1024
        vmem_limit_bytes = None  # 8 MiB resident fits the 16 MiB scoped default
        min_steps = 3
        native_bf16 = False      # no bf16 VPU/EUP on v5e: one explicit f32 cast
    else:
        target_block_bytes = 2 * 1024 * 1024
        vmem_limit_bytes = None
        min_steps = 3
        native_bf16 = False

    if dtype == jnp.bfloat16 and native_bf16:
        compute_dtype = jnp.bfloat16
    elif dtype == jnp.float32:
        compute_dtype = jnp.float32
    else:
        compute_dtype = jnp.float32

    # Widest lane width that divides n exactly -> zero-copy reshape, no pad.
    # Fallback: 128 lanes with a tiny (<128-element) tail pad.
    lanes = 128
    for cand in (1024, 512, 256, 128):
        if n % cand == 0:
            lanes = cand
            break

    rows = pl.cdiv(n, lanes)
    pad_elems = rows * lanes - n   # 0 in the common (divisible) case

    x_flat = x.reshape(-1)
    if pad_elems:
        x_flat = jnp.pad(x_flat, (0, pad_elems))
    x2d = x_flat.reshape(rows, lanes)

    # Block rows: ~target_block_bytes per buffer, multiple of `sub`.
    bm = target_block_bytes // (lanes * itemsize)
    bm = max(sub, (bm // sub) * sub)
    # Ensure enough grid steps for pipeline overlap (and both TCs on v7x),
    # but only when there is enough data to split cleanly.
    if pl.cdiv(rows, bm) < min_steps and rows >= min_steps * sub:
        per_step = pl.cdiv(rows, min_steps)
        bm = ((per_step + sub - 1) // sub) * sub
    bm = min(bm, rows)   # if clamped, the block equals the full array dim
    grid = (pl.cdiv(rows, bm),)

    compiler_params = pltpu.CompilerParams(
        dimension_semantics=("parallel",),
        vmem_limit_bytes=vmem_limit_bytes,
    )

    out2d = pl.pallas_call(
        functools.partial(_tanhexp_kernel, compute_dtype=compute_dtype),
        out_shape=jax.ShapeDtypeStruct((rows, lanes), dtype),
        grid_spec=pl.GridSpec(
            grid=grid,
            in_specs=[pl.BlockSpec((bm, lanes), lambda i: (i, 0))],
            out_specs=pl.BlockSpec((bm, lanes), lambda i: (i, 0)),
        ),
        compiler_params=compiler_params,
        cost_estimate=pl.CostEstimate(
            flops=3 * n,
            transcendentals=2 * n,
            bytes_accessed=2 * n * itemsize,
        ),
    )(x2d)

    if pad_elems:
        return out2d.reshape(-1)[:n].reshape(orig_shape)
    return out2d.reshape(orig_shape)


if __name__ == "__main__":
    key = jax.random.PRNGKey(0)
    # NCHW input, matching PyTorch convention.
    x = jax.random.normal(key, (2, 4, 16, 16), dtype=jnp.float32)

    y = tanh_exp(x)
    y = jax.block_until_ready(y)

    # Reference check in plain JAX.
    y_ref = x * jnp.tanh(jnp.exp(x))
    assert y.shape == x.shape and y.dtype == x.dtype
    assert jnp.allclose(y, y_ref, atol=1e-5, rtol=1e-5)

    print("KERNEL_OK")
</pallas_src>

<mosaic_0001>
module attributes {stable_mosaic.version = 11 : i64} {
  func.func @_tanhexp_kernel(%arg0: i32, %arg1: memref<2x1024xf32, #tpu.memory_space<vmem>>, %arg2: memref<2x1024xf32, #tpu.memory_space<vmem>>) attributes {dimension_semantics = [#tpu.dimension_semantics<parallel>], iteration_bounds = array<i64: 1>, scalar_prefetch = 0 : i64, scratch_operands = 0 : i64, tpu.core_type = #tpu.core_type<tc>, window_params = [{transform_indices = @transform_0, window_bounds = array<i64: 2, 1024>}, {transform_indices = @transform_1, window_bounds = array<i64: 2, 1024>}]} {
    %c0 = arith.constant 0 : index
    %c0_0 = arith.constant 0 : index
    %0 = vector.load %arg1[%c0, %c0_0] : memref<2x1024xf32, #tpu.memory_space<vmem>>, vector<2x1024xf32>
    %1 = math.exp %0 : vector<2x1024xf32>
    %2 = math.tanh %1 : vector<2x1024xf32>
    %3 = arith.mulf %0, %2 : vector<2x1024xf32>
    %c0_1 = arith.constant 0 : index
    %c0_2 = arith.constant 0 : index
    %4 = vector.load %arg2[%c0_1, %c0_2] : memref<2x1024xf32, #tpu.memory_space<vmem>>, vector<2x1024xf32>
    tpu.vector_store %arg2[%c0_1, %c0_2], %3 {strides = array<i32>} : memref<2x1024xf32, #tpu.memory_space<vmem>>, vector<2x1024xf32>,
    return
  }
  func.func @transform_0(%arg0: i32) -> (i32, i32) {
    %c0_i32 = arith.constant 0 : i32
    %c0_i32_0 = arith.constant 0 : i32
    return %arg0, %c0_i32 : i32, i32
  }
  func.func @transform_1(%arg0: i32) -> (i32, i32) {
    %c0_i32 = arith.constant 0 : i32
    %c0_i32_0 = arith.constant 0 : i32
    return %arg0, %c0_i32 : i32, i32
  }
}

</mosaic_0001>

<llo_original>
// kernel: tpu_custom_call.1
$region0: #{tpu_custom_call.1}
  #allocation0 [shape = 'u32[]', space=smem, size = 0x4, offset = 0x4, fixed_abs, tag = 'smem constant byte address 0x4 - core index']
  #allocation1 [shape = 'u32[144,128]{1,0:T(1,128)}', space=vmem, size = 0x12000, scoped, tag = 'internal scratch']
  %s0 = inlined_call_operand.hbm [shape: f32[2,1024], index: 0, kind: input, shape index: {}]
  %s1 = inlined_call_operand.hbm [shape: f32[2,1024], index: 1, kind: output, shape index: {}]
  %s2 = sld [smem:[#allocation0]]
  $region18: #{tpu_custom_call.1} parent=0
    _
  %s4 = ssub.s32 1, %s2
  %s5 = scalar_select 0, %s4, %s2
  $region1: #{tpu_custom_call.1} parent=0
    #allocation2 [shape = 'u8[8192]{0}', space=vmem, size = 0x2000, scoped, tag = 'input window, operand 0, single buffered']
    #allocation3 [shape = 's32[1]{0}', space=sflag, size = 0x4, scoped, tag = 'scoped memory for tpu_custom_call.1']
    #allocation4 [shape = 's32[1]{0}', space=sflag, size = 0x4, scoped, tag = 'scoped memory for tpu_custom_call.1']
    #allocation5 [shape = 'u8[8192]{0}', space=vmem, size = 0x2000, scoped, tag = 'output window, operand 0, single buffered']
    %6 = vsyncpa [#allocation3], 0
    %7 = vsyncpa [#allocation4], 0
    // Predicated region
    $region2: #{tpu_custom_call.1} parent=1 // pred_check
      _
    $region3: #{tpu_custom_call.1} parent=1 // pred_check_branch
      %9 = sbr.rel (0) target = $region5
    $region4: #{tpu_custom_call.1} parent=1 // pred_region
      %s11 = ssub.s32 256, 256
      %12 = vsyncadd [#allocation3], %s11
      %s14 = sshll.u32 [#allocation2], 4
      %s15 = int_to_ptr.vmem [resolvable:$true] %s14
      %17 = dma.hbm_to_vmem [thread:$0]  %s0, 256, %s15, [#allocation3]
    $region5: #{tpu_custom_call.1} parent=1 // pred_fallthru
      _
    // Predicated region
    $region6: #{tpu_custom_call.1} parent=1 // pred_check
      _
    $region7: #{tpu_custom_call.1} parent=1 // pred_check_branch
      %19 = sbr.rel (0) target = $region9
    $region8: #{tpu_custom_call.1} parent=1 // pred_region
      %20 = dma.done [#allocation3], 256
    $region9: #{tpu_custom_call.1} parent=1 // pred_fallthru
      _
    %v21 = vld [vmem:[#allocation2] sm:$0xff]
    %v22 = vld [vmem:[#allocation2 + $0x8] sm:$0xff]
    %v23 = vmul.f32 %v21, 1.442695
    %v24 = vpow.pop %v23
    %v25 = vmul.f32 %v22, 1.442695
    %v26 = vpow.pop %v25
    %v27 = vtanh.pop %v24
    %v28 = vtanh.pop %v26
    %v29 = vmul.f32 %v21, %v27
    %v30 = vmul.f32 %v22, %v28
    %31 = vst [vmem:[#allocation5] sm:$0xff] %v29
    %32 = vst [vmem:[#allocation5 + $0x8] sm:$0xff] %v30
    // Predicated region
    $region10: #{tpu_custom_call.1} parent=1 // pred_check
      _
    $region11: #{tpu_custom_call.1} parent=1 // pred_check_branch
      %34 = sbr.rel (0) target = $region13
    $region12: #{tpu_custom_call.1} parent=1 // pred_region
      %s36 = ssub.s32 256, 256
      %37 = vsyncadd [#allocation4], %s36
      %s39 = sshll.u32 [#allocation5], 4
      %s40 = int_to_ptr.vmem [resolvable:$true] %s39
      %42 = dma.vmem_to_hbm [thread:$0]  %s40, 256, %s1, [#allocation4]
    $region13: #{tpu_custom_call.1} parent=1 // pred_fallthru
      _
    // Predicated region
    $region14: #{tpu_custom_call.1} parent=1 // pred_check
      _
    $region15: #{tpu_custom_call.1} parent=1 // pred_check_branch
      %44 = sbr.rel (0) target = $region17
    $region16: #{tpu_custom_call.1} parent=1 // pred_region
      %45 = dma.done [#allocation4], 256
    $region17: #{tpu_custom_call.1} parent=1 // pred_fallthru
      _
    %46 = vsyncpa [#allocation3], 1
    %47 = vsyncpa [#allocation4], 1

</llo_original>
